<compile_context>
chip_gen: v5e
topology: v5e:2x2
jax: 0.10.0
libtpu: 0.0.40
codegen_flags: <defaults>
</compile_context>

<pallas_src>
import jax
import jax.numpy as jnp
from jax.experimental import pallas as pl
from jax.experimental.pallas import tpu as pltpu


def _round_up(x, m):
    return ((x + m - 1) // m) * m


def critic_kernel(x_ref, w1_ref, b1_ref, w2_ref, b2_ref, w4_ref, b4_ref, o_ref):
    # Layer 1: single K = n_states + n_actions matmul (concat fused in wrapper),
    # bf16 operands / f32 accumulation, f32 bias + ReLU on the VPU.
    h1 = jnp.dot(x_ref[...], w1_ref[...],
                 preferred_element_type=jnp.float32) + b1_ref[...]
    h1 = jnp.maximum(h1, 0.0)

    # Layer 2: bf16 operands / f32 accumulation.
    h2 = jnp.dot(h1.astype(jnp.bfloat16), w2_ref[...],
                 preferred_element_type=jnp.float32) + b2_ref[...]
    h2 = jnp.maximum(h2, 0.0)

    # Layer 3 (hidden -> 1): off the MXU — VPU multiply + XLU lane reduction
    # instead of an N=1 matmul that would pad the output to a full MXU tile.
    q = jnp.sum(h2 * w4_ref[...], axis=-1, keepdims=True) + b4_ref[0, 0]
    o_ref[...] = q.astype(o_ref.dtype)


def critic_forward(state, action, params, *, tb=4096):
    """state: (B, n_states), action: (B, n_actions). Returns (B, 1) f32.

    Matmuls run with bf16 operands / f32 accumulation (deliberate numerics
    tradeoff for the MXU's native bf16 path)."""
    w1, b1, w2, b2, w4, b4 = params
    B, n_states = state.shape
    n_actions = action.shape[1]
    in_dim = n_states + n_actions
    hidden = w1.shape[1]

    # Fused concat in the wrapper; bf16 matmul operands.
    x = jnp.concatenate(
        [state.astype(jnp.float32), action.astype(jnp.float32)], axis=1
    ).astype(jnp.bfloat16)
    w1_bf = w1.astype(jnp.bfloat16)
    w2_bf = w2.astype(jnp.bfloat16)
    b1_f = b1.astype(jnp.float32).reshape(1, hidden)
    b2_f = b2.astype(jnp.float32).reshape(1, hidden)
    w4_row = w4.astype(jnp.float32).reshape(1, hidden)   # used on the VPU, keep f32
    b4_s = b4.astype(jnp.float32).reshape(1, 1)

    # Batch tile: multiple of 8 sublanes, capped at `tb` rows per grid step.
    # If one tile would cover a large batch, split into two tiles so the
    # "parallel" batch axis can land on both TensorCores (v7x megacore).
    TB = min(tb, _round_up(B, 8))
    if B >= 512 and pl.cdiv(B, TB) == 1:
        TB = _round_up(pl.cdiv(B, 2), 8)
    G = pl.cdiv(B, TB)
    B_pad = G * TB
    if B_pad != B:
        x = jnp.pad(x, ((0, B_pad - B), (0, 0)))

    flops = 2 * B_pad * (in_dim * hidden + hidden * hidden + hidden)
    bytes_accessed = (2 * B_pad * in_dim + 4 * B_pad          # streamed x, q
                      + 2 * (in_dim * hidden + hidden * hidden)  # bf16 weights
                      + 4 * (3 * hidden + 1))                   # f32 biases + w4
    cost = pl.CostEstimate(flops=flops, transcendentals=0,
                           bytes_accessed=bytes_accessed)

    resident = lambda shape: pl.BlockSpec(shape, lambda i: (0, 0))

    out = pl.pallas_call(
        critic_kernel,
        out_shape=jax.ShapeDtypeStruct((B_pad, 1), jnp.float32),
        grid=(G,),
        in_specs=[
            pl.BlockSpec((TB, in_dim), lambda i: (i, 0)),   # streamed x tile
            resident(w1_bf.shape),                          # resident weights
            resident(b1_f.shape),
            resident(w2_bf.shape),
            resident(b2_f.shape),
            resident(w4_row.shape),
            pl.BlockSpec(memory_space=pltpu.MemorySpace.SMEM),  # (1,1) scalar b4
        ],
        out_specs=pl.BlockSpec((TB, 1), lambda i: (i, 0)),
        compiler_params=pltpu.CompilerParams(
            dimension_semantics=("parallel",),   # megacore split on v7x
            vmem_limit_bytes=32 * 1024 * 1024,
        ),
        cost_estimate=cost,
    )(x, w1_bf, b1_f, w2_bf, b2_f, w4_row, b4_s)

    return out[:B]


def init_params(key, n_states, n_actions, hidden_dim_1, init_w=0.01):
    """Parameter init mirroring the PyTorch module. Weights stored (in, out);
    biases (1, out)."""
    in_dim = n_states + n_actions
    k1, k2, k3, k4, k5, k6 = jax.random.split(key, 6)

    def torch_default(kw, kb, fan_in, fan_out):
        bound = 1.0 / jnp.sqrt(fan_in)
        w = jax.random.uniform(kw, (fan_in, fan_out), jnp.float32, -bound, bound)
        b = jax.random.uniform(kb, (1, fan_out), jnp.float32, -bound, bound)
        return w, b

    w1, b1 = torch_default(k1, k2, in_dim, hidden_dim_1)
    w2, b2 = torch_default(k3, k4, hidden_dim_1, hidden_dim_1)
    w4 = jax.random.uniform(k5, (hidden_dim_1, 1), jnp.float32, -init_w, init_w)
    b4 = jax.random.uniform(k6, (1, 1), jnp.float32, -init_w, init_w)
    return (w1, b1, w2, b2, w4, b4)


def _reference(state, action, params):
    w1, b1, w2, b2, w4, b4 = params
    x = jnp.concatenate([state, action], axis=1)
    h = jnp.maximum(x @ w1 + b1, 0.0)
    h = jnp.maximum(h @ w2 + b2, 0.0)
    return h @ w4 + b4


if __name__ == "__main__":
    n_states, n_actions, hidden = 8, 4, 32
    key = jax.random.PRNGKey(0)
    ks1, ka1, kp, ks2, ka2, ks3, ka3 = jax.random.split(key, 7)
    params = init_params(kp, n_states, n_actions, hidden)

    # bf16 matmul operands -> compare against the f32 reference with a
    # loosened tolerance (deliberate numerics tradeoff for the critic head).
    TOL = dict(atol=2e-2, rtol=2e-2)

    # Small test (single grid step, TB == B).
    B = 8
    state = jax.random.normal(ks1, (B, n_states), jnp.float32)
    action = jax.random.normal(ka1, (B, n_actions), jnp.float32)
    q = jax.block_until_ready(critic_forward(state, action, params))
    ref = _reference(state, action, params)
    assert q.shape == (B, 1), q.shape
    assert jnp.allclose(q, ref, **TOL), float(jnp.abs(q - ref).max())

    # Medium test exercising the batch grid (multiple tiles + row padding).
    B2 = 300
    state2 = jax.random.normal(ks2, (B2, n_states), jnp.float32)
    action2 = jax.random.normal(ka2, (B2, n_actions), jnp.float32)
    q2 = jax.block_until_ready(critic_forward(state2, action2, params, tb=128))
    ref2 = _reference(state2, action2, params)
    assert q2.shape == (B2, 1), q2.shape
    assert jnp.allclose(q2, ref2, **TOL), float(jnp.abs(q2 - ref2).max())

    # Larger test exercising the default tile size and the G>=2 megacore split.
    B3 = 2048
    state3 = jax.random.normal(ks3, (B3, n_states), jnp.float32)
    action3 = jax.random.normal(ka3, (B3, n_actions), jnp.float32)
    q3 = jax.block_until_ready(critic_forward(state3, action3, params))
    ref3 = _reference(state3, action3, params)
    assert q3.shape == (B3, 1), q3.shape
    assert jnp.allclose(q3, ref3, **TOL), float(jnp.abs(q3 - ref3).max())

    print("KERNEL_OK")
</pallas_src>

<mosaic_0001>
module attributes {stable_mosaic.version = 11 : i64} {
  func.func @critic_kernel(%arg0: i32, %arg1: memref<8x12xbf16, #tpu.memory_space<vmem>>, %arg2: memref<12x32xbf16, #tpu.memory_space<vmem>>, %arg3: memref<1x32xf32, #tpu.memory_space<vmem>>, %arg4: memref<32x32xbf16, #tpu.memory_space<vmem>>, %arg5: memref<1x32xf32, #tpu.memory_space<vmem>>, %arg6: memref<1x32xf32, #tpu.memory_space<vmem>>, %arg7: memref<1x1xf32, #tpu.memory_space<smem>>, %arg8: memref<8x1xf32, #tpu.memory_space<vmem>>) attributes {dimension_semantics = [#tpu.dimension_semantics<parallel>], iteration_bounds = array<i64: 1>, scalar_prefetch = 0 : i64, scratch_operands = 0 : i64, tpu.core_type = #tpu.core_type<tc>, window_params = [{transform_indices = @transform_0, window_bounds = array<i64: 8, 12>}, {pipeline_mode = #tpu.pipeline_mode<synchronous>, transform_indices = @transform_1, window_bounds = array<i64: 12, 32>}, {pipeline_mode = #tpu.pipeline_mode<synchronous>, transform_indices = @transform_2, window_bounds = array<i64: 1, 32>}, {pipeline_mode = #tpu.pipeline_mode<synchronous>, transform_indices = @transform_3, window_bounds = array<i64: 32, 32>}, {pipeline_mode = #tpu.pipeline_mode<synchronous>, transform_indices = @transform_4, window_bounds = array<i64: 1, 32>}, {pipeline_mode = #tpu.pipeline_mode<synchronous>, transform_indices = @transform_5, window_bounds = array<i64: 1, 32>}, {transform_indices = @transform_6, window_bounds = array<i64: 1, 1>}, {transform_indices = @transform_7, window_bounds = array<i64: 8, 1>}]} {
    %c0 = arith.constant 0 : index
    %c0_0 = arith.constant 0 : index
    %0 = vector.load %arg1[%c0, %c0_0] : memref<8x12xbf16, #tpu.memory_space<vmem>>, vector<8x12xbf16>
    %c0_1 = arith.constant 0 : index
    %c0_2 = arith.constant 0 : index
    %1 = vector.load %arg2[%c0_1, %c0_2] : memref<12x32xbf16, #tpu.memory_space<vmem>>, vector<12x32xbf16>
    %cst = arith.constant dense<0.000000e+00> : vector<8x32xf32>
    %2 = tpu.matmul %0, %1, %cst {dimension_numbers = #tpu.dot_dimension_numbers<[1], [0], [0], [1], [0, 0, 1, 1], [], []>} : vector<8x12xbf16>, vector<12x32xbf16>, vector<8x32xf32> -> vector<8x32xf32>
    %c0_3 = arith.constant 0 : index
    %c0_4 = arith.constant 0 : index
    %3 = vector.load %arg3[%c0_3, %c0_4] : memref<1x32xf32, #tpu.memory_space<vmem>>, vector<1x32xf32>
    %4 = vector.broadcast %3 : vector<1x32xf32> to vector<8x32xf32>
    %5 = arith.addf %2, %4 : vector<8x32xf32>
    %cst_5 = arith.constant 0.000000e+00 : f32
    %6 = vector.broadcast %cst_5 : f32 to vector<8x32xf32>
    %7 = arith.maximumf %5, %6 : vector<8x32xf32>
    %8 = arith.truncf %7 : vector<8x32xf32> to vector<8x32xbf16>
    %c0_6 = arith.constant 0 : index
    %c0_7 = arith.constant 0 : index
    %9 = vector.load %arg4[%c0_6, %c0_7] : memref<32x32xbf16, #tpu.memory_space<vmem>>, vector<32x32xbf16>
    %cst_8 = arith.constant dense<0.000000e+00> : vector<8x32xf32>
    %10 = tpu.matmul %8, %9, %cst_8 {dimension_numbers = #tpu.dot_dimension_numbers<[1], [0], [0], [1], [0, 0, 1, 1], [], []>} : vector<8x32xbf16>, vector<32x32xbf16>, vector<8x32xf32> -> vector<8x32xf32>
    %c0_9 = arith.constant 0 : index
    %c0_10 = arith.constant 0 : index
    %11 = vector.load %arg5[%c0_9, %c0_10] : memref<1x32xf32, #tpu.memory_space<vmem>>, vector<1x32xf32>
    %12 = vector.broadcast %11 : vector<1x32xf32> to vector<8x32xf32>
    %13 = arith.addf %10, %12 : vector<8x32xf32>
    %cst_11 = arith.constant 0.000000e+00 : f32
    %14 = vector.broadcast %cst_11 : f32 to vector<8x32xf32>
    %15 = arith.maximumf %13, %14 : vector<8x32xf32>
    %c0_12 = arith.constant 0 : index
    %c0_13 = arith.constant 0 : index
    %16 = vector.load %arg6[%c0_12, %c0_13] : memref<1x32xf32, #tpu.memory_space<vmem>>, vector<1x32xf32>
    %17 = vector.broadcast %16 : vector<1x32xf32> to vector<8x32xf32>
    %18 = arith.mulf %15, %17 : vector<8x32xf32>
    %cst_14 = arith.constant dense<0.000000e+00> : vector<8xf32>
    %19 = vector.multi_reduction <add>, %18, %cst_14 [1] : vector<8x32xf32> to vector<8xf32>
    %20 = vector.shape_cast %19 : vector<8xf32> to vector<8x1xf32>
    %c0_15 = arith.constant 0 : index
    %c0_16 = arith.constant 0 : index
    %21 = memref.load %arg7[%c0_15, %c0_16] : memref<1x1xf32, #tpu.memory_space<smem>>
    %22 = vector.broadcast %21 : f32 to vector<8x1xf32>
    %23 = arith.addf %20, %22 : vector<8x1xf32>
    %c0_17 = arith.constant 0 : index
    %c0_18 = arith.constant 0 : index
    %24 = vector.load %arg8[%c0_17, %c0_18] : memref<8x1xf32, #tpu.memory_space<vmem>>, vector<8x1xf32>
    tpu.vector_store %arg8[%c0_17, %c0_18], %23 {strides = array<i32>} : memref<8x1xf32, #tpu.memory_space<vmem>>, vector<8x1xf32>,
    return
  }
  func.func @transform_0(%arg0: i32) -> (i32, i32) {
    %c0_i32 = arith.constant 0 : i32
    %c0_i32_0 = arith.constant 0 : i32
    return %arg0, %c0_i32 : i32, i32
  }
  func.func @transform_1(%arg0: i32) -> (i32, i32) {
    %c0_i32 = arith.constant 0 : i32
    %c0_i32_0 = arith.constant 0 : i32
    %c0_i32_1 = arith.constant 0 : i32
    return %c0_i32, %c0_i32_0 : i32, i32
  }
  func.func @transform_2(%arg0: i32) -> (i32, i32) {
    %c0_i32 = arith.constant 0 : i32
    %c0_i32_0 = arith.constant 0 : i32
    %c0_i32_1 = arith.constant 0 : i32
    return %c0_i32, %c0_i32_0 : i32, i32
  }
  func.func @transform_3(%arg0: i32) -> (i32, i32) {
    %c0_i32 = arith.constant 0 : i32
    %c0_i32_0 = arith.constant 0 : i32
    %c0_i32_1 = arith.constant 0 : i32
    return %c0_i32, %c0_i32_0 : i32, i32
  }
  func.func @transform_4(%arg0: i32) -> (i32, i32) {
    %c0_i32 = arith.constant 0 : i32
    %c0_i32_0 = arith.constant 0 : i32
    %c0_i32_1 = arith.constant 0 : i32
    return %c0_i32, %c0_i32_0 : i32, i32
  }
  func.func @transform_5(%arg0: i32) -> (i32, i32) {
    %c0_i32 = arith.constant 0 : i32
    %c0_i32_0 = arith.constant 0 : i32
    %c0_i32_1 = arith.constant 0 : i32
    return %c0_i32, %c0_i32_0 : i32, i32
  }
  func.func @transform_6(%arg0: i32) -> (i32, i32) {
    %c0_i32 = arith.constant 0 : i32
    %c0_i32_0 = arith.constant 0 : i32
    %c0_i32_1 = arith.constant 0 : i32
    return %c0_i32, %c0_i32_0 : i32, i32
  }
  func.func @transform_7(%arg0: i32) -> (i32, i32) {
    %c0_i32 = arith.constant 0 : i32
    %c0_i32_0 = arith.constant 0 : i32
    return %arg0, %c0_i32 : i32, i32
  }
}

</mosaic_0001>

<llo_original>
// kernel: tpu_custom_call.1
$region0: #{tpu_custom_call.1}
  #allocation0 [shape = 'u32[]', space=smem, size = 0x4, offset = 0x4, fixed_abs, tag = 'smem constant byte address 0x4 - core index']
  #allocation1 [shape = 'u32[72,128]{1,0:T(1,128)}', space=vmem, size = 0x9000, scoped, tag = 'internal scratch']
  #allocation2 [shape = 'f32[1,1]{1,0:T(1,128)S(6)}', space=smem, size = 0x200, scoped, tag = 'scoped memory for tpu_custom_call.1']
  %s0 = inlined_call_operand.hbm [shape: bf16[8,12], index: 0, kind: input, shape index: {}]
  %s1 = inlined_call_operand.hbm [shape: bf16[12,32], index: 1, kind: input, shape index: {}]
  %s2 = inlined_call_operand.vmem [shape: f32[1,32], index: 2, kind: input, shape index: {}]
  %s3 = inlined_call_operand.hbm [shape: bf16[32,32], index: 3, kind: input, shape index: {}]
  %s4 = inlined_call_operand.vmem [shape: f32[1,32], index: 4, kind: input, shape index: {}]
  %s5 = inlined_call_operand.vmem [shape: f32[1,32], index: 5, kind: input, shape index: {}]
  %s6 = inlined_call_operand.<no memory space> [shape: f32[1,1], index: 6, kind: input, shape index: {}]
  %s7 = inlined_call_operand.vmem [shape: f32[8,1], index: 7, kind: output, shape index: {}]
  %s8 = sld [smem:[#allocation0]]
  $region50: #{tpu_custom_call.1} parent=0
    _
  %s10 = ssub.s32 1, %s8
  %s11 = scalar_select 0, %s10, %s8
  %12 = sst [smem:[#allocation2]] %s6
  $region1: #{tpu_custom_call.1} parent=0
    #allocation3 [shape = 'u8[2048]{0}', space=vmem, size = 0x800, scoped, tag = 'input window, operand 0, single buffered']
    #allocation4 [shape = 's32[1]{0}', space=sflag, size = 0x4, scoped, tag = 'scoped memory for tpu_custom_call.1']
    #allocation5 [shape = 'u8[4096]{0}', space=vmem, size = 0x1000, scoped, tag = 'input window, operand 1, single buffered']
    #allocation6 [shape = 's32[1]{0}', space=sflag, size = 0x4, scoped, tag = 'scoped memory for tpu_custom_call.1']
    #allocation7 [shape = 'u8[8192]{0}', space=vmem, size = 0x2000, scoped, tag = 'input window, operand 3, single buffered']
    %13 = vsyncpa [#allocation4], 0
    %14 = vsyncpa [#allocation6], 0
    // Predicated region
    $region2: #{tpu_custom_call.1} parent=1 // pred_check
      _
    $region3: #{tpu_custom_call.1} parent=1 // pred_check_branch
      %16 = sbr.rel (0) target = $region5
    $region4: #{tpu_custom_call.1} parent=1 // pred_region
      %18 = vsyncadd [#allocation4], 0
      %s20 = sshll.u32 %s0, 4
      %s21 = int_to_ptr.hbm [resolvable:$true] %s20
      %s22 = sshll.u32 [#allocation3], 4
      %s23 = int_to_ptr.vmem [resolvable:$true] %s22
      %25 = dma.hbm_to_vmem [thread:$0]  %s21, 64, %s23, [#allocation4]
    $region5: #{tpu_custom_call.1} parent=1 // pred_fallthru
      _
    // Predicated region
    $region6: #{tpu_custom_call.1} parent=1 // pred_check
      _
    $region7: #{tpu_custom_call.1} parent=1 // pred_check_branch
      %27 = sbr.rel (0) target = $region9
    $region8: #{tpu_custom_call.1} parent=1 // pred_region
      %29 = vsyncadd [#allocation6], 0
      %s30 = sshll.u32 %s1, 4
      %s31 = int_to_ptr.hbm [resolvable:$true] %s30
      %s32 = sshll.u32 [#allocation5], 4
      %s33 = int_to_ptr.vmem [resolvable:$true] %s32
      %38 = dma.hbm_to_vmem [thread:$0]  %s31, 128, %s33, [#allocation6], 64, 64, 4
    $region9: #{tpu_custom_call.1} parent=1 // pred_fallthru
      _
    // Predicated region
    $region10: #{tpu_custom_call.1} parent=1 // pred_check
      _
    $region11: #{tpu_custom_call.1} parent=1 // pred_check_branch
      %40 = sbr.rel (0) target = $region13
    $region12: #{tpu_custom_call.1} parent=1 // pred_region
      _
    $region13: #{tpu_custom_call.1} parent=1 // pred_fallthru
      _
    // Predicated region
    $region14: #{tpu_custom_call.1} parent=1 // pred_check
      _
    $region15: #{tpu_custom_call.1} parent=1 // pred_check_branch
      %42 = sbr.rel (0) target = $region17
    $region16: #{tpu_custom_call.1} parent=1 // pred_region
      %44 = vsyncadd [#allocation6], 0
      %s45 = sshll.u32 %s3, 4
      %s46 = int_to_ptr.hbm [resolvable:$true] %s45
      %s47 = sshll.u32 [#allocation7], 4
      %s48 = int_to_ptr.vmem [resolvable:$true] %s47
      %53 = dma.hbm_to_vmem [thread:$0]  %s46, 256, %s48, [#allocation6], 64, 64, 4
    $region17: #{tpu_custom_call.1} parent=1 // pred_fallthru
      _
    // Predicated region
    $region18: #{tpu_custom_call.1} parent=1 // pred_check
      _
    $region19: #{tpu_custom_call.1} parent=1 // pred_check_branch
      %55 = sbr.rel (0) target = $region21
    $region20: #{tpu_custom_call.1} parent=1 // pred_region
      _
    $region21: #{tpu_custom_call.1} parent=1 // pred_fallthru
      _
    // Predicated region
    $region22: #{tpu_custom_call.1} parent=1 // pred_check
      _
    $region23: #{tpu_custom_call.1} parent=1 // pred_check_branch
      %57 = sbr.rel (0) target = $region25
    $region24: #{tpu_custom_call.1} parent=1 // pred_region
      _
    $region25: #{tpu_custom_call.1} parent=1 // pred_fallthru
      _
    // Predicated region
    $region26: #{tpu_custom_call.1} parent=1 // pred_check
      _
    $region27: #{tpu_custom_call.1} parent=1 // pred_check_branch
      %59 = sbr.rel (0) target = $region29
    $region28: #{tpu_custom_call.1} parent=1 // pred_region
      _
    $region29: #{tpu_custom_call.1} parent=1 // pred_fallthru
      _
    // Predicated region
    $region30: #{tpu_custom_call.1} parent=1 // pred_check
      _
    $region31: #{tpu_custom_call.1} parent=1 // pred_check_branch
      %61 = sbr.rel (0) target = $region33
    $region32: #{tpu_custom_call.1} parent=1 // pred_region
      %63 = dma.done [#allocation4], 64
    $region33: #{tpu_custom_call.1} parent=1 // pred_fallthru
      _
    // Predicated region
    $region34: #{tpu_custom_call.1} parent=1 // pred_check
      _
    $region35: #{tpu_custom_call.1} parent=1 // pred_check_branch
      %65 = sbr.rel (0) target = $region37
    $region36: #{tpu_custom_call.1} parent=1 // pred_region
      %67 = dma.done [#allocation6], 128
    $region37: #{tpu_custom_call.1} parent=1 // pred_fallthru
      _
    // Predicated region
    $region38: #{tpu_custom_call.1} parent=1 // pred_check
      _
    $region39: #{tpu_custom_call.1} parent=1 // pred_check_branch
      %69 = sbr.rel (0) target = $region41
    $region40: #{tpu_custom_call.1} parent=1 // pred_region
      %71 = dma.done [#allocation6], 256
    $region41: #{tpu_custom_call.1} parent=1 // pred_fallthru
      _
    %v73 = vld [vmem:[#allocation3] sm:$0xf]
    %v74 = vld [vmem:[#allocation5] sm:$0xf]
    %v75 = vld [vmem:[#allocation5 + $0x4] sm:$0x3]
    %v76 = vld [vmem:[%s2] sm:$0x1]
    %v78 = vperm.slane %v76, 0
    %v82 = vunpack.c.l.b16 %v74
    %v83 = vunpack.c.l.b16 %v75
    %v84 = vpack.c.b16 %v83, %v82
    %vm85 = vcmask 97280
    %v87 = vsel %vm85, %v73, 0
    %vm89 = vcmask 1045504
    %v91 = vsel %vm89, %v84, 0
    %93 = vmatpush.bf16.msra.mxu0 0
    %94 = vmatpush.bf16.msra.mxu0 0
    %95 = vmatpush.bf16.msra.mxu0 0
    %96 = vmatpush.bf16.msra.mxu0 0
    %97 = vmatpush.bf16.msra.mxu0 0
    %98 = vmatpush.bf16.msra.mxu0 0
    %99 = vmatpush.bf16.msra.mxu0 0
    %100 = vmatpush.bf16.msra.mxu0 %v91
    %101 = vmatmul.bf16.gmra.mxu0 %v87
    %v102 = vpop.f32.mrf.mxu0
    %v103 = vadd.f32 %v78, %v102
    %v104 = vpop.f32.mrf.mxu0
    %105 = vdwg.mxu0
    %v106 = vmax.f32 %v103, 0.0
    %v107 = vpack.c.bf16 %v106, %v106
    %v108 = vld [vmem:[#allocation7] sm:$0xf]
    %v109 = vld [vmem:[#allocation7 + $0x4] sm:$0xf]
    %v110 = vld [vmem:[#allocation7 + $0x8] sm:$0xf]
    %v111 = vld [vmem:[#allocation7 + $0xc] sm:$0xf]
    %v112 = vld [vmem:[%s4] sm:$0x1]
    %v114 = vperm.slane %v112, 0
    %v120 = vunpack.c.l.b16 %v108
    %v121 = vunpack.c.l.b16 %v109
    %v122 = vunpack.c.l.b16 %v110
    %v123 = vunpack.c.l.b16 %v111
    %v124 = vpack.c.b16 %v121, %v120
    %v125 = vpack.c.b16 %v123, %v122
    %vm128 = vcmask 261120
    %v130 = vsel %vm128, %v107, 0
    %132 = vmatpush.bf16.msra.mxu0 0
    %133 = vmatpush.bf16.msra.mxu0 0
    %134 = vmatpush.bf16.msra.mxu0 0
    %135 = vmatpush.bf16.msra.mxu0 0
    %136 = vmatpush.bf16.msra.mxu0 0
    %137 = vmatpush.bf16.msra.mxu0 0
    %138 = vmatpush.bf16.msra.mxu0 %v125
    %139 = vmatpush.bf16.msra.mxu0 %v124
    %140 = vmatmul.bf16.gmra.mxu0 %v130
    %v141 = vpop.f32.mrf.mxu0
    %v142 = vadd.f32 %v114, %v141
    %v143 = vpop.f32.mrf.mxu0
    %144 = vdwg.mxu0
    %v145 = vmax.f32 %v142, 0.0
    %v146 = vld [vmem:[%s5] sm:$0x1]
    %v148 = vperm.slane %v146, 0
    %v150 = vmul.f32 %v145, %v148
    %v151 = vsel %vm128, %v150, 0.0
    %152 = vadd.xlane.f32.xlu0 %v151
    %v153 = vpop.xlane.xlu0 %152
    %s154 = sld [smem:[#allocation2]]
    %v155 = vstv %s154
    %v156 = vadd.f32 %v153, %v155
    %vm157 = vcmask 7168
    %158 = vst.msk [vmem:[%s7] sm:$0xff] %vm157, %v156
    // Predicated region
    $region42: #{tpu_custom_call.1} parent=1 // pred_check
      _
    $region43: #{tpu_custom_call.1} parent=1 // pred_check_branch
      %160 = sbr.rel (0) target = $region45
    $region44: #{tpu_custom_call.1} parent=1 // pred_region
      _
    $region45: #{tpu_custom_call.1} parent=1 // pred_fallthru
      _
    // Predicated region
    $region46: #{tpu_custom_call.1} parent=1 // pred_check
      _
    $region47: #{tpu_custom_call.1} parent=1 // pred_check_branch
      %162 = sbr.rel (0) target = $region49
    $region48: #{tpu_custom_call.1} parent=1 // pred_region
      _
    $region49: #{tpu_custom_call.1} parent=1 // pred_fallthru
      _
    %163 = vsyncpa [#allocation4], 1
    %164 = vsyncpa [#allocation6], 1

</llo_original>
